<compile_context>
chip_gen: v7x
topology: tpu7x:2x2x1
jax: 0.10.0
libtpu: 0.0.40
codegen_flags: <defaults>
</compile_context>

<pallas_src>
import functools

import jax
import jax.numpy as jnp
from jax.experimental import pallas as pl
from jax.experimental.pallas import tpu as pltpu

# bf16 inputs keep the v6e/v7x 256x256 MXU fed and halve DMA bytes; accumulation
# stays f32.  Use jnp.float32 here for exact float32 reference parity.
COMPUTE_DTYPE = jnp.bfloat16
LANE = 128      # TPU lane width (last dim)
SUBLANE = 8     # TPU sublane width (second-to-last dim)


def _round_up(x, m):
    return (x + m - 1) // m * m


# -----------------------------------------------------------------------------
# Pallas kernel.  One grid step = one Head of a MultiHead block.
#
#     out = relu(x @ W_key) @ W_out[mid:] + bias
#
# bias = relu(emb @ W_emb) @ W_out[:mid], precomputed in the wrapper and
# broadcast to every patch row (free VPU add in the kernel).  All operands are
# zero-padded to (sublane, lane)-aligned shapes, so every load, matmul and the
# store are dense.  Dropout is identity (eval mode).
# -----------------------------------------------------------------------------
def _head_kernel(x_ref, wk_ref, wo_ref, bias_ref, out_ref):
    k = jnp.dot(x_ref[...], wk_ref[...], preferred_element_type=jnp.float32)
    k = jnp.maximum(k, 0.0)                                   # ReLU
    out = jnp.dot(k.astype(wo_ref.dtype), wo_ref[...],
                  preferred_element_type=jnp.float32)
    out_ref[...] = (out + bias_ref[...]).astype(out_ref.dtype)


def multihead_block_pallas(x_stack, wk_stack, wo_stack, bias_stack):
    """x/bias: (H, Mp, Kp); wk: (H, Kp, MIDp); wo: (H, MIDp, Kp) -> (H, Mp, Kp) f32."""
    H, Mp, Kp = x_stack.shape
    MIDp = wk_stack.shape[-1]
    return pl.pallas_call(
        _head_kernel,
        out_shape=jax.ShapeDtypeStruct((H, Mp, Kp), jnp.float32),
        grid=(H,),
        in_specs=[
            pl.BlockSpec((None, Mp, Kp),   lambda h: (h, 0, 0)),   # patch rows (all batches)
            pl.BlockSpec((None, Kp, MIDp), lambda h: (h, 0, 0)),   # W_key  (zero-padded)
            pl.BlockSpec((None, MIDp, Kp), lambda h: (h, 0, 0)),   # W_out[mid:] (zero-padded)
            pl.BlockSpec((None, Mp, Kp),   lambda h: (h, 0, 0)),   # hoisted emb bias
        ],
        out_specs=pl.BlockSpec((None, Mp, Kp), lambda h: (h, 0, 0)),
        compiler_params=pltpu.CompilerParams(
            dimension_semantics=("parallel",)),   # heads independent -> both v7x TCs
    )(x_stack, wk_stack, wo_stack, bias_stack)


# -----------------------------------------------------------------------------
# JAX glue: bilinear resize (F.interpolate, align_corners=False, no antialias),
# patch (un)rearrange, parameter init, MultiHead/Decoder loops.
# -----------------------------------------------------------------------------
def bilinear_resize_nchw(x, out_sz):
    B, C, H, W = x.shape
    if H == out_sz and W == out_sz:
        return x

    def src_idx(o, inp):
        scale = inp / o
        s = (jnp.arange(o, dtype=jnp.float32) + 0.5) * scale - 0.5
        s = jnp.clip(s, 0.0, None)
        i0 = jnp.minimum(jnp.floor(s).astype(jnp.int32), inp - 1)
        i1 = jnp.minimum(i0 + 1, inp - 1)
        w1 = jnp.clip(s - i0.astype(jnp.float32), 0.0, 1.0)
        return i0, i1, w1

    y0, y1, wy = src_idx(out_sz, H)
    x0, x1, wx = src_idx(out_sz, W)
    a = x[:, :, y0][:, :, :, x0]
    b = x[:, :, y0][:, :, :, x1]
    c = x[:, :, y1][:, :, :, x0]
    d = x[:, :, y1][:, :, :, x1]
    wx_ = wx[None, None, None, :]
    wy_ = wy[None, None, :, None]
    return (a * (1 - wx_) + b * wx_) * (1 - wy_) + (c * (1 - wx_) + d * wx_) * wy_


def to_patches(x, p):
    # 'b c (u m) (v n) -> b (u v) (c m n)'
    B, C, H, W = x.shape
    u, v = H // p, W // p
    y = x.reshape(B, C, u, p, v, p).transpose(0, 2, 4, 1, 3, 5)
    return y.reshape(B, u * v, C * p * p), u, v


def from_patches(y, u, v, p):
    # 'b (u v) (c m n) -> b c (u m) (v n)'  with c=3
    B = y.shape[0]
    z = y.reshape(B, u, v, 3, p, p).transpose(0, 3, 1, 4, 2, 5)
    return z.reshape(B, 3, u * p, v * p)


def join(layers):
    # TODO(synk): U.join is not defined in the reference; interpreted as
    # bilinear-resize every layer to the largest spatial size and sum.
    tgt = max(l.shape[-1] for l in layers)
    acc = None
    for l in layers:
        r = bilinear_resize_nchw(l, tgt)
        acc = r if acc is None else acc + r
    return acc


def multihead_apply(block_params, sizes, p_sz, emb_mean, mean):
    """One MultiHead block: all of its Heads fused into a single pallas_call."""
    B = mean.shape[0]
    K = 3 * p_sz * p_sz
    Kp = _round_up(K, LANE)
    Ns = [sz * sz for sz in sizes]
    Mp = _round_up(max(B * max(Ns), SUBLANE), SUBLANE)

    e = emb_mean[:, 0, :]                                            # (B, e_sz)
    x_slabs, bias_slabs, meta = [], [], []
    for head_params, sz, N in zip(block_params, sizes, Ns):
        o = bilinear_resize_nchw(mean, p_sz * sz)                    # (B, 3, p*sz, p*sz)
        patches, u, v = to_patches(o, p_sz)                          # (B, N, K)
        M = B * N
        x = jnp.pad(patches.reshape(M, K), ((0, Mp - M), (0, Kp - K)))
        x_slabs.append(x.astype(COMPUTE_DTYPE))
        # Hoisted emb path: relu(emb @ W_emb) @ W_out[:mid]  -> per-batch (B, K) bias
        e_bias = jnp.maximum(e @ head_params["w_emb"], 0.0) @ head_params["w_oe"]
        bias = jnp.repeat(e_bias, N, axis=0)                         # row b*N+n -> batch b
        bias_slabs.append(
            jnp.pad(bias, ((0, Mp - M), (0, Kp - K))).astype(jnp.float32))
        meta.append((u, v, N, M))

    out = multihead_block_pallas(
        jnp.stack(x_slabs),
        jnp.stack([hp["w_key_p"] for hp in block_params]),
        jnp.stack([hp["w_ok_p"] for hp in block_params]),
        jnp.stack(bias_slabs),
    )

    layers = [mean]
    for h, (u, v, N, M) in enumerate(meta):
        y = out[h, :M, :K].reshape(B, N, K)
        layers.append(from_patches(y, u, v, p_sz))
    return join(layers)


def decoder_apply(params, blocks_cfg, p_sz, emb, mean):
    emb_mean = emb.mean(axis=1, keepdims=True)                       # (B, 1, e_sz)
    res = []
    for block_params, sizes in zip(params, blocks_cfg):
        mean = multihead_apply(block_params, sizes, p_sz, emb_mean, mean)
        res.append(mean)
    return res


def init_head(key, p_sz, e_sz, mid_sz):
    K = 3 * p_sz * p_sz
    Kp = _round_up(K, LANE)
    MIDp = _round_up(mid_sz, LANE)
    k1, k2, k3 = jax.random.split(key, 3)
    # All Linears are bias=False in the reference module.  Stored as (in, out).
    w_emb = jax.random.normal(k1, (e_sz, mid_sz), jnp.float32) * 0.05
    w_key = jax.random.normal(k2, (K, mid_sz), jnp.float32) * 0.05
    w_out = jax.random.normal(k3, (2 * mid_sz, K), jnp.float32) * 0.05
    w_oe, w_ok = w_out[:mid_sz], w_out[mid_sz:]
    # Lane-dense zero-padded copies used by the Pallas kernel.
    w_key_p = jnp.pad(w_key, ((0, Kp - K), (0, MIDp - mid_sz))).astype(COMPUTE_DTYPE)
    w_ok_p = jnp.pad(w_ok, ((0, MIDp - mid_sz), (0, Kp - K))).astype(COMPUTE_DTYPE)
    return {"w_emb": w_emb, "w_oe": w_oe, "w_key_p": w_key_p, "w_ok_p": w_ok_p}


def init_decoder(key, p_sz, e_sz, mid_sz, blocks_cfg):
    params = []
    for sizes in blocks_cfg:
        heads = []
        for _ in sizes:
            key, sub = jax.random.split(key)
            heads.append(init_head(sub, p_sz, e_sz, mid_sz))
        params.append(heads)
    return params


if __name__ == "__main__":
    p_sz, e_sz, mid_sz = 4, 16, 32
    blocks_cfg = ((1, 2), (2,))
    B, T = 2, 8
    H0 = W0 = 8

    key = jax.random.PRNGKey(0)
    k_p, k_e, k_m = jax.random.split(key, 3)
    params = init_decoder(k_p, p_sz, e_sz, mid_sz, blocks_cfg)
    emb = jax.random.normal(k_e, (B, T, e_sz), jnp.float32)
    mean = jax.random.normal(k_m, (B, 3, H0, W0), jnp.float32)

    @jax.jit
    def fwd(params, emb, mean):
        return decoder_apply(params, blocks_cfg, p_sz, emb, mean)

    res = fwd(params, emb, mean)
    jax.block_until_ready(res)
    assert len(res) == len(blocks_cfg)
    for r in res:
        assert r.shape[0] == B and r.shape[1] == 3
    print("KERNEL_OK")
</pallas_src>

<mosaic_0001>
module attributes {stable_mosaic.version = 11 : i64} {
  func.func @_head_kernel(%arg0: i32, %arg1: memref<1x8x128xbf16, #tpu.memory_space<vmem>>, %arg2: memref<1x128x128xbf16, #tpu.memory_space<vmem>>, %arg3: memref<1x128x128xbf16, #tpu.memory_space<vmem>>, %arg4: memref<1x8x128xf32, #tpu.memory_space<vmem>>, %arg5: memref<1x8x128xf32, #tpu.memory_space<vmem>>) attributes {dimension_semantics = [#tpu.dimension_semantics<parallel>], iteration_bounds = array<i64: 2>, scalar_prefetch = 0 : i64, scratch_operands = 0 : i64, tpu.core_type = #tpu.core_type<tc>, window_params = [{transform_indices = @transform_0, window_bounds = array<i64: 1, 8, 128>}, {transform_indices = @transform_1, window_bounds = array<i64: 1, 128, 128>}, {transform_indices = @transform_2, window_bounds = array<i64: 1, 128, 128>}, {transform_indices = @transform_3, window_bounds = array<i64: 1, 8, 128>}, {transform_indices = @transform_4, window_bounds = array<i64: 1, 8, 128>}]} {
    %c0 = arith.constant 0 : index
    %c0_0 = arith.constant 0 : index
    %c0_1 = arith.constant 0 : index
    %0 = vector.load %arg1[%c0, %c0_0, %c0_1] : memref<1x8x128xbf16, #tpu.memory_space<vmem>>, vector<1x8x128xbf16>
    %1 = vector.shape_cast %0 : vector<1x8x128xbf16> to vector<8x128xbf16>
    %c0_2 = arith.constant 0 : index
    %c0_3 = arith.constant 0 : index
    %c0_4 = arith.constant 0 : index
    %2 = vector.load %arg2[%c0_2, %c0_3, %c0_4] : memref<1x128x128xbf16, #tpu.memory_space<vmem>>, vector<1x128x128xbf16>
    %3 = vector.shape_cast %2 : vector<1x128x128xbf16> to vector<128x128xbf16>
    %cst = arith.constant dense<0.000000e+00> : vector<8x128xf32>
    %4 = tpu.matmul %1, %3, %cst {dimension_numbers = #tpu.dot_dimension_numbers<[1], [0], [0], [1], [0, 0, 1, 1], [], []>} : vector<8x128xbf16>, vector<128x128xbf16>, vector<8x128xf32> -> vector<8x128xf32>
    %cst_5 = arith.constant 0.000000e+00 : f32
    %5 = vector.broadcast %cst_5 : f32 to vector<8x128xf32>
    %6 = arith.maximumf %4, %5 : vector<8x128xf32>
    %7 = arith.truncf %6 : vector<8x128xf32> to vector<8x128xbf16>
    %c0_6 = arith.constant 0 : index
    %c0_7 = arith.constant 0 : index
    %c0_8 = arith.constant 0 : index
    %8 = vector.load %arg3[%c0_6, %c0_7, %c0_8] : memref<1x128x128xbf16, #tpu.memory_space<vmem>>, vector<1x128x128xbf16>
    %9 = vector.shape_cast %8 : vector<1x128x128xbf16> to vector<128x128xbf16>
    %cst_9 = arith.constant dense<0.000000e+00> : vector<8x128xf32>
    %10 = tpu.matmul %7, %9, %cst_9 {dimension_numbers = #tpu.dot_dimension_numbers<[1], [0], [0], [1], [0, 0, 1, 1], [], []>} : vector<8x128xbf16>, vector<128x128xbf16>, vector<8x128xf32> -> vector<8x128xf32>
    %c0_10 = arith.constant 0 : index
    %c0_11 = arith.constant 0 : index
    %c0_12 = arith.constant 0 : index
    %11 = vector.load %arg4[%c0_10, %c0_11, %c0_12] : memref<1x8x128xf32, #tpu.memory_space<vmem>>, vector<1x8x128xf32>
    %12 = vector.shape_cast %11 : vector<1x8x128xf32> to vector<8x128xf32>
    %13 = arith.addf %10, %12 : vector<8x128xf32>
    %c0_13 = arith.constant 0 : index
    %c0_14 = arith.constant 0 : index
    %c0_15 = arith.constant 0 : index
    %14 = vector.load %arg5[%c0_13, %c0_14, %c0_15] : memref<1x8x128xf32, #tpu.memory_space<vmem>>, vector<1x8x128xf32>
    %15 = vector.shape_cast %14 : vector<1x8x128xf32> to vector<8x128xf32>
    %16 = vector.shape_cast %13 : vector<8x128xf32> to vector<1x8x128xf32>
    tpu.vector_store %arg5[%c0_13, %c0_14, %c0_15], %16 {strides = array<i32>} : memref<1x8x128xf32, #tpu.memory_space<vmem>>, vector<1x8x128xf32>,
    return
  }
  func.func @transform_0(%arg0: i32) -> (i32, i32, i32) {
    %c0_i32 = arith.constant 0 : i32
    %c0_i32_0 = arith.constant 0 : i32
    %c0_i32_1 = arith.constant 0 : i32
    return %arg0, %c0_i32, %c0_i32_0 : i32, i32, i32
  }
  func.func @transform_1(%arg0: i32) -> (i32, i32, i32) {
    %c0_i32 = arith.constant 0 : i32
    %c0_i32_0 = arith.constant 0 : i32
    %c0_i32_1 = arith.constant 0 : i32
    return %arg0, %c0_i32, %c0_i32_0 : i32, i32, i32
  }
  func.func @transform_2(%arg0: i32) -> (i32, i32, i32) {
    %c0_i32 = arith.constant 0 : i32
    %c0_i32_0 = arith.constant 0 : i32
    %c0_i32_1 = arith.constant 0 : i32
    return %arg0, %c0_i32, %c0_i32_0 : i32, i32, i32
  }
  func.func @transform_3(%arg0: i32) -> (i32, i32, i32) {
    %c0_i32 = arith.constant 0 : i32
    %c0_i32_0 = arith.constant 0 : i32
    %c0_i32_1 = arith.constant 0 : i32
    return %arg0, %c0_i32, %c0_i32_0 : i32, i32, i32
  }
  func.func @transform_4(%arg0: i32) -> (i32, i32, i32) {
    %c0_i32 = arith.constant 0 : i32
    %c0_i32_0 = arith.constant 0 : i32
    %c0_i32_1 = arith.constant 0 : i32
    return %arg0, %c0_i32, %c0_i32_0 : i32, i32, i32
  }
}

module attributes {stable_mosaic.version = 11 : i64} {
  func.func @_head_kernel(%arg0: i32, %arg1: memref<1x8x128xbf16, #tpu.memory_space<vmem>>, %arg2: memref<1x128x128xbf16, #tpu.memory_space<vmem>>, %arg3: memref<1x128x128xbf16, #tpu.memory_space<vmem>>, %arg4: memref<1x8x128xf32, #tpu.memory_space<vmem>>, %arg5: memref<1x8x128xf32, #tpu.memory_space<vmem>>) attributes {dimension_semantics = [#tpu.dimension_semantics<parallel>], iteration_bounds = array<i64: 1>, scalar_prefetch = 0 : i64, scratch_operands = 0 : i64, tpu.core_type = #tpu.core_type<tc>, window_params = [{transform_indices = @transform_0, window_bounds = array<i64: 1, 8, 128>}, {transform_indices = @transform_1, window_bounds = array<i64: 1, 128, 128>}, {transform_indices = @transform_2, window_bounds = array<i64: 1, 128, 128>}, {transform_indices = @transform_3, window_bounds = array<i64: 1, 8, 128>}, {transform_indices = @transform_4, window_bounds = array<i64: 1, 8, 128>}]} {
    %c0 = arith.constant 0 : index
    %c0_0 = arith.constant 0 : index
    %c0_1 = arith.constant 0 : index
    %0 = vector.load %arg1[%c0, %c0_0, %c0_1] : memref<1x8x128xbf16, #tpu.memory_space<vmem>>, vector<1x8x128xbf16>
    %1 = vector.shape_cast %0 : vector<1x8x128xbf16> to vector<8x128xbf16>
    %c0_2 = arith.constant 0 : index
    %c0_3 = arith.constant 0 : index
    %c0_4 = arith.constant 0 : index
    %2 = vector.load %arg2[%c0_2, %c0_3, %c0_4] : memref<1x128x128xbf16, #tpu.memory_space<vmem>>, vector<1x128x128xbf16>
    %3 = vector.shape_cast %2 : vector<1x128x128xbf16> to vector<128x128xbf16>
    %cst = arith.constant dense<0.000000e+00> : vector<8x128xf32>
    %4 = tpu.matmul %1, %3, %cst {dimension_numbers = #tpu.dot_dimension_numbers<[1], [0], [0], [1], [0, 0, 1, 1], [], []>} : vector<8x128xbf16>, vector<128x128xbf16>, vector<8x128xf32> -> vector<8x128xf32>
    %cst_5 = arith.constant 0.000000e+00 : f32
    %5 = vector.broadcast %cst_5 : f32 to vector<8x128xf32>
    %6 = arith.maximumf %4, %5 : vector<8x128xf32>
    %7 = arith.truncf %6 : vector<8x128xf32> to vector<8x128xbf16>
    %c0_6 = arith.constant 0 : index
    %c0_7 = arith.constant 0 : index
    %c0_8 = arith.constant 0 : index
    %8 = vector.load %arg3[%c0_6, %c0_7, %c0_8] : memref<1x128x128xbf16, #tpu.memory_space<vmem>>, vector<1x128x128xbf16>
    %9 = vector.shape_cast %8 : vector<1x128x128xbf16> to vector<128x128xbf16>
    %cst_9 = arith.constant dense<0.000000e+00> : vector<8x128xf32>
    %10 = tpu.matmul %7, %9, %cst_9 {dimension_numbers = #tpu.dot_dimension_numbers<[1], [0], [0], [1], [0, 0, 1, 1], [], []>} : vector<8x128xbf16>, vector<128x128xbf16>, vector<8x128xf32> -> vector<8x128xf32>
    %c0_10 = arith.constant 0 : index
    %c0_11 = arith.constant 0 : index
    %c0_12 = arith.constant 0 : index
    %11 = vector.load %arg4[%c0_10, %c0_11, %c0_12] : memref<1x8x128xf32, #tpu.memory_space<vmem>>, vector<1x8x128xf32>
    %12 = vector.shape_cast %11 : vector<1x8x128xf32> to vector<8x128xf32>
    %13 = arith.addf %10, %12 : vector<8x128xf32>
    %c0_13 = arith.constant 0 : index
    %c0_14 = arith.constant 0 : index
    %c0_15 = arith.constant 0 : index
    %14 = vector.load %arg5[%c0_13, %c0_14, %c0_15] : memref<1x8x128xf32, #tpu.memory_space<vmem>>, vector<1x8x128xf32>
    %15 = vector.shape_cast %14 : vector<1x8x128xf32> to vector<8x128xf32>
    %16 = vector.shape_cast %13 : vector<8x128xf32> to vector<1x8x128xf32>
    tpu.vector_store %arg5[%c0_13, %c0_14, %c0_15], %16 {strides = array<i32>} : memref<1x8x128xf32, #tpu.memory_space<vmem>>, vector<1x8x128xf32>,
    return
  }
  func.func @transform_0(%arg0: i32) -> (i32, i32, i32) {
    %c0_i32 = arith.constant 0 : i32
    %c0_i32_0 = arith.constant 0 : i32
    %c0_i32_1 = arith.constant 0 : i32
    return %arg0, %c0_i32, %c0_i32_0 : i32, i32, i32
  }
  func.func @transform_1(%arg0: i32) -> (i32, i32, i32) {
    %c0_i32 = arith.constant 0 : i32
    %c0_i32_0 = arith.constant 0 : i32
    %c0_i32_1 = arith.constant 0 : i32
    return %arg0, %c0_i32, %c0_i32_0 : i32, i32, i32
  }
  func.func @transform_2(%arg0: i32) -> (i32, i32, i32) {
    %c0_i32 = arith.constant 0 : i32
    %c0_i32_0 = arith.constant 0 : i32
    %c0_i32_1 = arith.constant 0 : i32
    return %arg0, %c0_i32, %c0_i32_0 : i32, i32, i32
  }
  func.func @transform_3(%arg0: i32) -> (i32, i32, i32) {
    %c0_i32 = arith.constant 0 : i32
    %c0_i32_0 = arith.constant 0 : i32
    %c0_i32_1 = arith.constant 0 : i32
    return %arg0, %c0_i32, %c0_i32_0 : i32, i32, i32
  }
  func.func @transform_4(%arg0: i32) -> (i32, i32, i32) {
    %c0_i32 = arith.constant 0 : i32
    %c0_i32_0 = arith.constant 0 : i32
    %c0_i32_1 = arith.constant 0 : i32
    return %arg0, %c0_i32, %c0_i32_0 : i32, i32, i32
  }
}

</mosaic_0001>

<llo_original>
// kernel: squeeze.7
$region0: #{squeeze.7}
  %s0 = inlined_call_operand.vmem [shape: f32[1,8,48], index: 0, kind: input, shape index: {}]
  %s1 = inlined_call_operand.vmem [shape: f32[2,2,2,3,4,4], index: 1, kind: output, shape index: {}]
  $region1: #{squeeze.7} parent=0
    #allocation0 [shape = 'u8[98304]{0}', space=vmem, size = 0x18000, scoped, tag = 'scoped mem for output reshape']
    %v2 = vld [vmem:[%s0] sm:$0xff]
    %vm3 = vcmask 31744
    %4 = vst.msk [vmem:[#allocation0] ss:$24 sm:$0xf] %vm3, %v2
    %5 = vst.msk [vmem:[#allocation0] ss:$24 sm:$0xf0] %vm3, %v2
    %v6 = vld.sshfl [vmem:[%s0] sm:$0xff pattern:$0x56741230]
    %7 = vrot.lane.b32.xlu0 %v6, 124
    %v8 = vpop.permute.xlu0 %7
    %vm9 = vcmask 31744
    %s10 = scalar_lea.vmem [#allocation0], 1
    %11 = vst.msk [vmem:[%s10] ss:$72 sm:$0x3] %vm9, %v8
    %s12 = scalar_lea.vmem [#allocation0], 97
    %13 = vst.msk [vmem:[%s12] ss:$-24 sm:$0xc] %vm9, %v8
    %s14 = scalar_lea.vmem [#allocation0], 4294967105
    %15 = vst.msk [vmem:[%s14] ss:$72 sm:$0x30] %vm9, %v8
    %s16 = scalar_lea.vmem [#allocation0], 289
    %17 = vst.msk [vmem:[%s16] ss:$-24 sm:$0xc0] %vm9, %v8
    %v18 = vld.sshfl [vmem:[%s0] sm:$0xff pattern:$0x56741230]
    %19 = vrot.lane.b32.xlu0 %v18, 120
    %v20 = vpop.permute.xlu0 %19
    %vm21 = vcmask 31744
    %s22 = scalar_lea.vmem [#allocation0], 2
    %23 = vst.msk [vmem:[%s22] ss:$72 sm:$0x3] %vm21, %v20
    %s24 = scalar_lea.vmem [#allocation0], 98
    %25 = vst.msk [vmem:[%s24] ss:$-24 sm:$0xc] %vm21, %v20
    %s26 = scalar_lea.vmem [#allocation0], 4294967106
    %27 = vst.msk [vmem:[%s26] ss:$72 sm:$0x30] %vm21, %v20
    %s28 = scalar_lea.vmem [#allocation0], 290
    %29 = vst.msk [vmem:[%s28] ss:$-24 sm:$0xc0] %vm21, %v20
    %v30 = vld.sshfl [vmem:[%s0] sm:$0xff pattern:$0x56741230]
    %31 = vrot.lane.b32.xlu0 %v30, 116
    %v32 = vpop.permute.xlu0 %31
    %vm33 = vcmask 31744
    %s34 = scalar_lea.vmem [#allocation0], 3
    %35 = vst.msk [vmem:[%s34] ss:$72 sm:$0x3] %vm33, %v32
    %s36 = scalar_lea.vmem [#allocation0], 99
    %37 = vst.msk [vmem:[%s36] ss:$-24 sm:$0xc] %vm33, %v32
    %s38 = scalar_lea.vmem [#allocation0], 4294967107
    %39 = vst.msk [vmem:[%s38] ss:$72 sm:$0x30] %vm33, %v32
    %s40 = scalar_lea.vmem [#allocation0], 291
    %41 = vst.msk [vmem:[%s40] ss:$-24 sm:$0xc0] %vm33, %v32
    %v42 = vld.sshfl [vmem:[%s0] sm:$0xff pattern:$0x67452301]
    %43 = vrot.lane.b32.xlu0 %v42, 112
    %v44 = vpop.permute.xlu0 %43
    %vm45 = vcmask 31744
    %s46 = scalar_lea.vmem [#allocation0], 32
    %47 = vst.msk [vmem:[%s46] ss:$-24 sm:$0x3] %vm45, %v44
    %s48 = scalar_lea.vmem [#allocation0], 128
    %49 = vst.msk [vmem:[%s48] ss:$-24 sm:$0xc] %vm45, %v44
    %s50 = scalar_lea.vmem [#allocation0], 224
    %51 = vst.msk [vmem:[%s50] ss:$-24 sm:$0x30] %vm45, %v44
    %s52 = scalar_lea.vmem [#allocation0], 320
    %53 = vst.msk [vmem:[%s52] ss:$-24 sm:$0xc0] %vm45, %v44
    %v54 = vld.sshfl [vmem:[%s0] sm:$0xff pattern:$0x67452301]
    %55 = vrot.lane.b32.xlu0 %v54, 108
    %v56 = vpop.permute.xlu0 %55
    %vm57 = vcmask 31744
    %s58 = scalar_lea.vmem [#allocation0], 33
    %59 = vst.msk [vmem:[%s58] ss:$-24 sm:$0x3] %vm57, %v56
    %s60 = scalar_lea.vmem [#allocation0], 129
    %61 = vst.msk [vmem:[%s60] ss:$-24 sm:$0xc] %vm57, %v56
    %s62 = scalar_lea.vmem [#allocation0], 225
    %63 = vst.msk [vmem:[%s62] ss:$-24 sm:$0x30] %vm57, %v56
    %s64 = scalar_lea.vmem [#allocation0], 321
    %65 = vst.msk [vmem:[%s64] ss:$-24 sm:$0xc0] %vm57, %v56
    %v66 = vld.sshfl [vmem:[%s0] sm:$0xff pattern:$0x67452301]
    %67 = vrot.lane.b32.xlu0 %v66, 104
    %v68 = vpop.permute.xlu0 %67
    %vm69 = vcmask 31744
    %s70 = scalar_lea.vmem [#allocation0], 34
    %71 = vst.msk [vmem:[%s70] ss:$-24 sm:$0x3] %vm69, %v68
    %s72 = scalar_lea.vmem [#allocation0], 130
    %73 = vst.msk [vmem:[%s72] ss:$-24 sm:$0xc] %vm69, %v68
    %s74 = scalar_lea.vmem [#allocation0], 226
    %75 = vst.msk [vmem:[%s74] ss:$-24 sm:$0x30] %vm69, %v68
    %s76 = scalar_lea.vmem [#allocation0], 322
    %77 = vst.msk [vmem:[%s76] ss:$-24 sm:$0xc0] %vm69, %v68
    %v78 = vld.sshfl [vmem:[%s0] sm:$0xff pattern:$0x67452301]
    %79 = vrot.lane.b32.xlu0 %v78, 100
    %v80 = vpop.permute.xlu0 %79
    %vm81 = vcmask 31744
    %s82 = scalar_lea.vmem [#allocation0], 35
    %83 = vst.msk [vmem:[%s82] ss:$-24 sm:$0x3] %vm81, %v80
    %s84 = scalar_lea.vmem [#allocation0], 131
    %85 = vst.msk [vmem:[%s84] ss:$-24 sm:$0xc] %vm81, %v80
    %s86 = scalar_lea.vmem [#allocation0], 227
    %87 = vst.msk [vmem:[%s86] ss:$-24 sm:$0x30] %vm81, %v80
    %s88 = scalar_lea.vmem [#allocation0], 323
    %89 = vst.msk [vmem:[%s88] ss:$-24 sm:$0xc0] %vm81, %v80
    %v90 = vld.sshfl [vmem:[%s0] sm:$0xff pattern:$0x74563012]
    %91 = vrot.lane.b32.xlu0 %v90, 96
    %v92 = vpop.permute.xlu0 %91
    %vm93 = vcmask 31744
    %s94 = scalar_lea.vmem [#allocation0], 64
    %95 = vst.msk [vmem:[%s94] ss:$-24 sm:$0x7] %vm93, %v92
    %s96 = scalar_lea.vmem [#allocation0], 4294967168
    %97 = vst.msk [vmem:[%s96] ss:$72 sm:$0x18] %vm93, %v92
    %s98 = scalar_lea.vmem [#allocation0], 256
    %99 = vst.msk [vmem:[%s98] ss:$-24 sm:$0x60] %vm93, %v92
    %s100 = scalar_lea.vmem [#allocation0], 177
    %101 = vst.msk [vmem:[%s100] sm:$0x80] %vm93, %v92
    %v102 = vld.sshfl [vmem:[%s0] sm:$0xff pattern:$0x74563012]
    %103 = vrot.lane.b32.xlu0 %v102, 92
    %v104 = vpop.permute.xlu0 %103
    %vm105 = vcmask 31744
    %s106 = scalar_lea.vmem [#allocation0], 65
    %107 = vst.msk [vmem:[%s106] ss:$-24 sm:$0x7] %vm105, %v104
    %s108 = scalar_lea.vmem [#allocation0], 4294967169
    %109 = vst.msk [vmem:[%s108] ss:$72 sm:$0x18] %vm105, %v104
    %s110 = scalar_lea.vmem [#allocation0], 257
    %111 = vst.msk [vmem:[%s110] ss:$-24 sm:$0x60] %vm105, %v104
    %s112 = scalar_lea.vmem [#allocation0], 178
    %113 = vst.msk [vmem:[%s112] sm:$0x80] %vm105, %v104
    %v114 = vld.sshfl [vmem:[%s0] sm:$0xff pattern:$0x74563012]
    %115 = vrot.lane.b32.xlu0 %v114, 88
    %v116 = vpop.permute.xlu0 %115
    %vm117 = vcmask 31744
    %s118 = scalar_lea.vmem [#allocation0], 66
    %119 = vst.msk [vmem:[%s118] ss:$-24 sm:$0x7] %vm117, %v116
    %s120 = scalar_lea.vmem [#allocation0], 4294967170
    %121 = vst.msk [vmem:[%s120] ss:$72 sm:$0x18] %vm117, %v116
    %s122 = scalar_lea.vmem [#allocation0], 258
    %123 = vst.msk [vmem:[%s122] ss:$-24 sm:$0x60] %vm117, %v116
    %s124 = scalar_lea.vmem [#allocation0], 179
    %125 = vst.msk [vmem:[%s124] sm:$0x80] %vm117, %v116
    %v126 = vld.sshfl [vmem:[%s0] sm:$0xff pattern:$0x74563012]
    %127 = vrot.lane.b32.xlu0 %v126, 84
    %v128 = vpop.permute.xlu0 %127
    %vm129 = vcmask 31744
    %s130 = scalar_lea.vmem [#allocation0], 67
    %131 = vst.msk [vmem:[%s130] ss:$-24 sm:$0x7] %vm129, %v128
    %s132 = scalar_lea.vmem [#allocation0], 4294967171
    %133 = vst.msk [vmem:[%s132] ss:$72 sm:$0x18] %vm129, %v128
    %s134 = scalar_lea.vmem [#allocation0], 259
    %135 = vst.msk [vmem:[%s134] ss:$-24 sm:$0x60] %vm129, %v128
    %s136 = scalar_lea.vmem [#allocation0], 180
    %137 = vst.msk [vmem:[%s136] sm:$0x80] %vm129, %v128
    %s139 = sshllo.u32 0, 4
    %v141 = vld [vmem:[#allocation0] sm:%s139]
    %s142 = sshllo.u32 0, 4
    %143 = vst [vmem:[%s1] sm:%s142] %v141
    %s144 = scalar_lea.vmem [#allocation0], 8
    %v145 = vld [vmem:[%s144] sm:%s139]
    %s146 = sshllo.u32 0, 4
    %s147 = scalar_lea.vmem %s1, 4
    %148 = vst [vmem:[%s147] sm:%s146] %v145
    %s149 = scalar_lea.vmem [#allocation0], 16
    %v150 = vld [vmem:[%s149] sm:%s139]
    %s151 = sshllo.u32 0, 4
    %s152 = smul.addr 4, 2
    %s153 = scalar_lea.vmem %s1, %s152
    %154 = vst [vmem:[%s153] sm:%s151] %v150
    %s155 = scalar_lea.vmem [#allocation0], 24
    %v156 = vld [vmem:[%s155] sm:%s139]
    %s157 = sshllo.u32 0, 4
    %s158 = smul.addr 4, 3
    %s159 = scalar_lea.vmem %s1, %s158
    %160 = vst [vmem:[%s159] sm:%s157] %v156
    %s161 = scalar_lea.vmem [#allocation0], 32
    %v162 = vld [vmem:[%s161] sm:%s139]
    %s163 = sshllo.u32 0, 4
    %s164 = smul.addr 4, 4
    %s165 = scalar_lea.vmem %s1, %s164
    %166 = vst [vmem:[%s165] sm:%s163] %v162
    %s167 = scalar_lea.vmem [#allocation0], 40
    %v168 = vld [vmem:[%s167] sm:%s139]
    %s169 = sshllo.u32 0, 4
    %s170 = smul.addr 4, 5
    %s171 = scalar_lea.vmem %s1, %s170
    %172 = vst [vmem:[%s171] sm:%s169] %v168
    %s173 = scalar_lea.vmem [#allocation0], 48
    %v174 = vld [vmem:[%s173] sm:%s139]
    %s175 = sshllo.u32 0, 4
    %s176 = smul.addr 4, 6
    %s177 = scalar_lea.vmem %s1, %s176
    %178 = vst [vmem:[%s177] sm:%s175] %v174
    %s179 = scalar_lea.vmem [#allocation0], 56
    %v180 = vld [vmem:[%s179] sm:%s139]
    %s181 = sshllo.u32 0, 4
    %s182 = smul.addr 4, 7
    %s183 = scalar_lea.vmem %s1, %s182
    %184 = vst [vmem:[%s183] sm:%s181] %v180
    %s185 = scalar_lea.vmem [#allocation0], 64
    %v186 = vld [vmem:[%s185] sm:%s139]
    %s187 = sshllo.u32 0, 4
    %s188 = smul.addr 4, 8
    %s189 = scalar_lea.vmem %s1, %s188
    %190 = vst [vmem:[%s189] sm:%s187] %v186
    %s191 = scalar_lea.vmem [#allocation0], 72
    %v192 = vld [vmem:[%s191] sm:%s139]
    %s193 = sshllo.u32 0, 4
    %s194 = smul.addr 4, 9
    %s195 = scalar_lea.vmem %s1, %s194
    %196 = vst [vmem:[%s195] sm:%s193] %v192
    %s197 = scalar_lea.vmem [#allocation0], 80
    %v198 = vld [vmem:[%s197] sm:%s139]
    %s199 = sshllo.u32 0, 4
    %s200 = smul.addr 4, 10
    %s201 = scalar_lea.vmem %s1, %s200
    %202 = vst [vmem:[%s201] sm:%s199] %v198
    %s203 = scalar_lea.vmem [#allocation0], 88
    %v204 = vld [vmem:[%s203] sm:%s139]
    %s205 = sshllo.u32 0, 4
    %s206 = smul.addr 4, 11
    %s207 = scalar_lea.vmem %s1, %s206
    %208 = vst [vmem:[%s207] sm:%s205] %v204
    %s209 = scalar_lea.vmem [#allocation0], 96
    %v210 = vld [vmem:[%s209] sm:%s139]
    %s211 = sshllo.u32 0, 4
    %s212 = smul.addr 4, 12
    %s213 = scalar_lea.vmem %s1, %s212
    %214 = vst [vmem:[%s213] sm:%s211] %v210
    %s215 = scalar_lea.vmem [#allocation0], 104
    %v216 = vld [vmem:[%s215] sm:%s139]
    %s217 = sshllo.u32 0, 4
    %s218 = smul.addr 4, 13
    %s219 = scalar_lea.vmem %s1, %s218
    %220 = vst [vmem:[%s219] sm:%s217] %v216
    %s221 = scalar_lea.vmem [#allocation0], 112
    %v222 = vld [vmem:[%s221] sm:%s139]
    %s223 = sshllo.u32 0, 4
    %s224 = smul.addr 4, 14
    %s225 = scalar_lea.vmem %s1, %s224
    %226 = vst [vmem:[%s225] sm:%s223] %v222
    %s227 = scalar_lea.vmem [#allocation0], 120
    %v228 = vld [vmem:[%s227] sm:%s139]
    %s229 = sshllo.u32 0, 4
    %s230 = smul.addr 4, 15
    %s231 = scalar_lea.vmem %s1, %s230
    %232 = vst [vmem:[%s231] sm:%s229] %v228
    %s233 = scalar_lea.vmem [#allocation0], 128
    %v234 = vld [vmem:[%s233] sm:%s139]
    %s235 = sshllo.u32 0, 4
    %s236 = smul.addr 4, 16
    %s237 = scalar_lea.vmem %s1, %s236
    %238 = vst [vmem:[%s237] sm:%s235] %v234
    %s239 = scalar_lea.vmem [#allocation0], 136
    %v240 = vld [vmem:[%s239] sm:%s139]
    %s241 = sshllo.u32 0, 4
    %s242 = smul.addr 4, 17
    %s243 = scalar_lea.vmem %s1, %s242
    %244 = vst [vmem:[%s243] sm:%s241] %v240
    %s245 = scalar_lea.vmem [#allocation0], 144
    %v246 = vld [vmem:[%s245] sm:%s139]
    %s247 = sshllo.u32 0, 4
    %s248 = smul.addr 4, 18
    %s249 = scalar_lea.vmem %s1, %s248
    %250 = vst [vmem:[%s249] sm:%s247] %v246
    %s251 = scalar_lea.vmem [#allocation0], 152
    %v252 = vld [vmem:[%s251] sm:%s139]
    %s253 = sshllo.u32 0, 4
    %s254 = smul.addr 4, 19
    %s255 = scalar_lea.vmem %s1, %s254
    %256 = vst [vmem:[%s255] sm:%s253] %v252
    %s257 = scalar_lea.vmem [#allocation0], 160
    %v258 = vld [vmem:[%s257] sm:%s139]
    %s259 = sshllo.u32 0, 4
    %s260 = smul.addr 4, 20
    %s261 = scalar_lea.vmem %s1, %s260
    %262 = vst [vmem:[%s261] sm:%s259] %v258
    %s263 = scalar_lea.vmem [#allocation0], 168
    %v264 = vld [vmem:[%s263] sm:%s139]
    %s265 = sshllo.u32 0, 4
    %s266 = smul.addr 4, 21
    %s267 = scalar_lea.vmem %s1, %s266
    %268 = vst [vmem:[%s267] sm:%s265] %v264
    %s269 = scalar_lea.vmem [#allocation0], 176
    %v270 = vld [vmem:[%s269] sm:%s139]
    %s271 = sshllo.u32 0, 4
    %s272 = smul.addr 4, 22
    %s273 = scalar_lea.vmem %s1, %s272
    %274 = vst [vmem:[%s273] sm:%s271] %v270
    %s275 = scalar_lea.vmem [#allocation0], 184
    %v276 = vld [vmem:[%s275] sm:%s139]
    %s277 = sshllo.u32 0, 4
    %s278 = smul.addr 4, 23
    %s279 = scalar_lea.vmem %s1, %s278
    %280 = vst [vmem:[%s279] sm:%s277] %v276

// kernel: squeeze.6
$region0: #{squeeze.6}
  %s0 = inlined_call_operand.vmem [shape: f32[1,2,48], index: 0, kind: input, shape index: {}]
  %s1 = inlined_call_operand.vmem [shape: f32[2,3,4,4], index: 1, kind: output, shape index: {}]
  $region1: #{squeeze.6} parent=0
    #allocation0 [shape = 'u8[24576]{0}', space=vmem, size = 0x6000, scoped, tag = 'scoped mem for output reshape']
    #allocation1 [shape = 'u8[4096]{0}', space=vmem, size = 0x1000, scoped, tag = 'scoped mem for input reshape']
    %s3 = sshllo.u32 0, 2
    %v4 = vld [vmem:[%s0] sm:%s3]
    %5 = vst [vmem:[#allocation1] sm:%s3] %v4
    %v6 = vld [vmem:[#allocation1] sm:$0x3]
    %vm7 = vcmask 31744
    %8 = vst.msk [vmem:[#allocation0] ss:$24 sm:$0x3] %vm7, %v6
    %v9 = vld [vmem:[#allocation1] sm:$0x3]
    %10 = vrot.lane.b32.xlu0 %v9, 124
    %v11 = vpop.permute.xlu0 %10
    %vm12 = vcmask 31744
    %s13 = scalar_lea.vmem [#allocation0], 1
    %14 = vst.msk [vmem:[%s13] ss:$24 sm:$0x3] %vm12, %v11
    %v15 = vld [vmem:[#allocation1] sm:$0x3]
    %16 = vrot.lane.b32.xlu0 %v15, 120
    %v17 = vpop.permute.xlu0 %16
    %vm18 = vcmask 31744
    %s19 = scalar_lea.vmem [#allocation0], 2
    %20 = vst.msk [vmem:[%s19] ss:$24 sm:$0x3] %vm18, %v17
    %v21 = vld [vmem:[#allocation1] sm:$0x3]
    %22 = vrot.lane.b32.xlu0 %v21, 116
    %v23 = vpop.permute.xlu0 %22
    %vm24 = vcmask 31744
    %s25 = scalar_lea.vmem [#allocation0], 3
    %26 = vst.msk [vmem:[%s25] ss:$24 sm:$0x3] %vm24, %v23
    %s27 = scalar_lea.vmem [#allocation1], 1
    %s28 = smov 3
    %v29 = vld [vmem:[%s27] ss:$-1 sm:%s28]
    %30 = vrot.lane.b32.xlu0 %v29, 112
    %v31 = vpop.permute.xlu0 %30
    %vm32 = vcmask 31744
    %s33 = scalar_lea.vmem [#allocation0], 32
    %34 = vst.msk [vmem:[%s33] ss:$-24 sm:$0x3] %vm32, %v31
    %s35 = scalar_lea.vmem [#allocation1], 1
    %s36 = smov 3
    %v37 = vld [vmem:[%s35] ss:$-1 sm:%s36]
    %38 = vrot.lane.b32.xlu0 %v37, 108
    %v39 = vpop.permute.xlu0 %38
    %vm40 = vcmask 31744
    %s41 = scalar_lea.vmem [#allocation0], 33
    %42 = vst.msk [vmem:[%s41] ss:$-24 sm:$0x3] %vm40, %v39
    %s43 = scalar_lea.vmem [#allocation1], 1
    %s44 = smov 3
    %v45 = vld [vmem:[%s43] ss:$-1 sm:%s44]
    %46 = vrot.lane.b32.xlu0 %v45, 104
    %v47 = vpop.permute.xlu0 %46
    %vm48 = vcmask 31744
    %s49 = scalar_lea.vmem [#allocation0], 34
    %50 = vst.msk [vmem:[%s49] ss:$-24 sm:$0x3] %vm48, %v47
    %s51 = scalar_lea.vmem [#allocation1], 1
    %s52 = smov 3
    %v53 = vld [vmem:[%s51] ss:$-1 sm:%s52]
    %54 = vrot.lane.b32.xlu0 %v53, 100
    %v55 = vpop.permute.xlu0 %54
    %vm56 = vcmask 31744
    %s57 = scalar_lea.vmem [#allocation0], 35
    %58 = vst.msk [vmem:[%s57] ss:$-24 sm:$0x3] %vm56, %v55
    %s59 = scalar_lea.vmem [#allocation1], 1
    %s60 = smov 3
    %v61 = vld [vmem:[%s59] ss:$-1 sm:%s60]
    %62 = vrot.lane.b32.xlu0 %v61, 96
    %v63 = vpop.permute.xlu0 %62
    %vm64 = vcmask 31744
    %s65 = scalar_lea.vmem [#allocation0], 40
    %66 = vst.msk [vmem:[%s65] ss:$-24 sm:$0x3] %vm64, %v63
    %s67 = scalar_lea.vmem [#allocation1], 1
    %s68 = smov 3
    %v69 = vld [vmem:[%s67] ss:$-1 sm:%s68]
    %70 = vrot.lane.b32.xlu0 %v69, 92
    %v71 = vpop.permute.xlu0 %70
    %vm72 = vcmask 31744
    %s73 = scalar_lea.vmem [#allocation0], 41
    %74 = vst.msk [vmem:[%s73] ss:$-24 sm:$0x3] %vm72, %v71
    %s75 = scalar_lea.vmem [#allocation1], 1
    %s76 = smov 3
    %v77 = vld [vmem:[%s75] ss:$-1 sm:%s76]
    %78 = vrot.lane.b32.xlu0 %v77, 88
    %v79 = vpop.permute.xlu0 %78
    %vm80 = vcmask 31744
    %s81 = scalar_lea.vmem [#allocation0], 42
    %82 = vst.msk [vmem:[%s81] ss:$-24 sm:$0x3] %vm80, %v79
    %s83 = scalar_lea.vmem [#allocation1], 1
    %s84 = smov 3
    %v85 = vld [vmem:[%s83] ss:$-1 sm:%s84]
    %86 = vrot.lane.b32.xlu0 %v85, 84
    %v87 = vpop.permute.xlu0 %86
    %vm88 = vcmask 31744
    %s89 = scalar_lea.vmem [#allocation0], 43
    %90 = vst.msk [vmem:[%s89] ss:$-24 sm:$0x3] %vm88, %v87
    %s92 = sshllo.u32 0, 4
    %v94 = vld [vmem:[#allocation0] sm:%s92]
    %s95 = sshllo.u32 0, 4
    %96 = vst [vmem:[%s1] sm:%s95] %v94
    %s97 = scalar_lea.vmem [#allocation0], 8
    %v98 = vld [vmem:[%s97] sm:%s92]
    %s99 = sshllo.u32 0, 4
    %s100 = scalar_lea.vmem %s1, 4
    %101 = vst [vmem:[%s100] sm:%s99] %v98
    %s102 = scalar_lea.vmem [#allocation0], 16
    %v103 = vld [vmem:[%s102] sm:%s92]
    %s104 = sshllo.u32 0, 4
    %s105 = smul.addr 4, 2
    %s106 = scalar_lea.vmem %s1, %s105
    %107 = vst [vmem:[%s106] sm:%s104] %v103
    %s108 = scalar_lea.vmem [#allocation0], 24
    %v109 = vld [vmem:[%s108] sm:%s92]
    %s110 = sshllo.u32 0, 4
    %s111 = smul.addr 4, 3
    %s112 = scalar_lea.vmem %s1, %s111
    %113 = vst [vmem:[%s112] sm:%s110] %v109
    %s114 = scalar_lea.vmem [#allocation0], 32
    %v115 = vld [vmem:[%s114] sm:%s92]
    %s116 = sshllo.u32 0, 4
    %s117 = smul.addr 4, 4
    %s118 = scalar_lea.vmem %s1, %s117
    %119 = vst [vmem:[%s118] sm:%s116] %v115
    %s120 = scalar_lea.vmem [#allocation0], 40
    %v121 = vld [vmem:[%s120] sm:%s92]
    %s122 = sshllo.u32 0, 4
    %s123 = smul.addr 4, 5
    %s124 = scalar_lea.vmem %s1, %s123
    %125 = vst [vmem:[%s124] sm:%s122] %v121

// kernel: fwd.2
$region0: #{fwd.2}
  #allocation0 [shape = 'u32[]', space=smem, size = 0x4, offset = 0x4, fixed_abs, tag = 'smem constant byte address 0x4 - core index']
  #allocation1 [shape = 'u32[144,128]{1,0:T(1,128)}', space=vmem, size = 0x12000, scoped, tag = 'internal scratch']
  %s0 = inlined_call_operand.vmem [shape: bf16[2,8,128], index: 0, kind: input, shape index: {}]
  %s1 = inlined_call_operand.vmem [shape: bf16[2,128,128], index: 1, kind: input, shape index: {}]
  %s2 = inlined_call_operand.vmem [shape: bf16[2,128,128], index: 2, kind: input, shape index: {}]
  %s3 = inlined_call_operand.vmem [shape: f32[2,8,128], index: 3, kind: input, shape index: {}]
  %s4 = inlined_call_operand.vmem [shape: f32[2,8,128], index: 4, kind: output, shape index: {}]
  %s5 = sld [smem:[#allocation0]]
  $region49: #{fwd.2} parent=0
    _
  %s7 = ssub.s32 1, %s5
  %s8 = scalar_select 0, %s7, %s5
  loop: start=0, step=1, limit=4
  $region2: #{fwd.2} parent=0 // loop_pre_header
    _
  $region3: #{fwd.2} parent=0 // loop_header
    %s10 = sphi 0, %s14
    %p11 = scmp.ge.s32.totalorder %s10, 4
    %s20 = sphi 0, %s22
    %s23 = sphi 0, %s20
    %s24 = sphi 0, %s23
    %s40 = sphi 0, %s24
    %s46 = sphi 0, %s48
    %s49 = sphi 0, %s46
    %s50 = sphi 0, %s49
    %s66 = sphi 0, %s50
    %s72 = sphi 0, %s74
    %s75 = sphi 0, %s72
    %s76 = sphi 0, %s75
    %s92 = sphi 0, %s76
    %s98 = sphi 0, %s100
    %s101 = sphi 0, %s98
    %s102 = sphi 0, %s101
    %s118 = sphi 0, %s102
    %s124 = sphi 0, %s126
    %s127 = sphi 0, %s124
    %s128 = sphi 0, %s127
    %s144 = sphi 0, %s128
  $region4: #{fwd.2} parent=0 // loop_header_branch
    %13 = sbr.rel (%p11) target = $region8
  $region5: #{fwd.2} parent=0 // loop_body
    %s15 = ssub.s32 %s10, 1
    %s16 = ssub.s32 %s10, 2
    %s17 = sadd.s32 %s10, 1
    %s18 = ssub.s32 %s10, %s17
    %p19 = scmp.eq.s32.totalorder %s18, 0
    %s21 = sadd.s32 %s20, 1
    %s22 = scalar_select %p19, %s20, %s21
    %p25 = pneg %p19
    %p26 = scmp.eq.s32.totalorder %s10, 1
    %p27 = por %p25, %p26
    %p28 = scmp.ne.s32.totalorder %s20, %s23
    %p29 = scmp.eq.s32.totalorder %s10, 0
    %p30 = por %p28, %p29
    %p31 = scmp.ne.s32.totalorder %s20, %s23
    %p32 = scmp.eq.s32.totalorder %s15, 1
    %p33 = por %p31, %p32
    %p34 = scmp.ne.s32.totalorder %s23, %s24
    %p35 = scmp.eq.s32.totalorder %s15, 0
    %p36 = por %p34, %p35
    %p37 = scmp.ne.s32.totalorder %s23, %s24
    %p38 = scmp.eq.s32.totalorder %s16, 1
    %p39 = por %p37, %p38
    %p41 = scmp.ne.s32.totalorder %s24, %s40
    %p42 = scmp.eq.s32.totalorder %s16, 0
    %p43 = por %p41, %p42
    %s44 = ssub.s32 %s10, %s17
    %p45 = scmp.eq.s32.totalorder %s44, 0
    %s47 = sadd.s32 %s46, 1
    %s48 = scalar_select %p45, %s46, %s47
    %p51 = pneg %p45
    %p52 = scmp.eq.s32.totalorder %s10, 1
    %p53 = por %p51, %p52
    %p54 = scmp.ne.s32.totalorder %s46, %s49
    %p55 = scmp.eq.s32.totalorder %s10, 0
    %p56 = por %p54, %p55
    %p57 = scmp.ne.s32.totalorder %s46, %s49
    %p58 = scmp.eq.s32.totalorder %s15, 1
    %p59 = por %p57, %p58
    %p60 = scmp.ne.s32.totalorder %s49, %s50
    %p61 = scmp.eq.s32.totalorder %s15, 0
    %p62 = por %p60, %p61
    %p63 = scmp.ne.s32.totalorder %s49, %s50
    %p64 = scmp.eq.s32.totalorder %s16, 1
    %p65 = por %p63, %p64
    %p67 = scmp.ne.s32.totalorder %s50, %s66
    %p68 = scmp.eq.s32.totalorder %s16, 0
    %p69 = por %p67, %p68
    %s70 = ssub.s32 %s10, %s17
    %p71 = scmp.eq.s32.totalorder %s70, 0
    %s73 = sadd.s32 %s72, 1
    %s74 = scalar_select %p71, %s72, %s73
    %p77 = pneg %p71
    %p78 = scmp.eq.s32.totalorder %s10, 1
    %p79 = por %p77, %p78
    %p80 = scmp.ne.s32.totalorder %s72, %s75
    %p81 = scmp.eq.s32.totalorder %s10, 0
    %p82 = por %p80, %p81
    %p83 = scmp.ne.s32.totalorder %s72, %s75
    %p84 = scmp.eq.s32.totalorder %s15, 1
    %p85 = por %p83, %p84
    %p86 = scmp.ne.s32.totalorder %s75, %s76
    %p87 = scmp.eq.s32.totalorder %s15, 0
    %p88 = por %p86, %p87
    %p89 = scmp.ne.s32.totalorder %s75, %s76
    %p90 = scmp.eq.s32.totalorder %s16, 1
    %p91 = por %p89, %p90
    %p93 = scmp.ne.s32.totalorder %s76, %s92
    %p94 = scmp.eq.s32.totalorder %s16, 0
    %p95 = por %p93, %p94
    %s96 = ssub.s32 %s10, %s17
    %p97 = scmp.eq.s32.totalorder %s96, 0
    %s99 = sadd.s32 %s98, 1
    %s100 = scalar_select %p97, %s98, %s99
    %p103 = pneg %p97
    %p104 = scmp.eq.s32.totalorder %s10, 1
    %p105 = por %p103, %p104
    %p106 = scmp.ne.s32.totalorder %s98, %s101
    %p107 = scmp.eq.s32.totalorder %s10, 0
    %p108 = por %p106, %p107
    %p109 = scmp.ne.s32.totalorder %s98, %s101
    %p110 = scmp.eq.s32.totalorder %s15, 1
    %p111 = por %p109, %p110
    %p112 = scmp.ne.s32.totalorder %s101, %s102
    %p113 = scmp.eq.s32.totalorder %s15, 0
    %p114 = por %p112, %p113
    %p115 = scmp.ne.s32.totalorder %s101, %s102
    %p116 = scmp.eq.s32.totalorder %s16, 1
    %p117 = por %p115, %p116
    %p119 = scmp.ne.s32.totalorder %s102, %s118
    %p120 = scmp.eq.s32.totalorder %s16, 0
    %p121 = por %p119, %p120
    %s122 = ssub.s32 %s10, %s17
    %p123 = scmp.eq.s32.totalorder %s122, 0
    %s125 = sadd.s32 %s124, 1
    %s126 = scalar_select %p123, %s124, %s125
    %p129 = pneg %p123
    %p130 = scmp.eq.s32.totalorder %s10, 1
    %p131 = por %p129, %p130
    %p132 = scmp.ne.s32.totalorder %s124, %s127
    %p133 = scmp.eq.s32.totalorder %s10, 0
    %p134 = por %p132, %p133
    %p135 = scmp.ne.s32.totalorder %s124, %s127
    %p136 = scmp.eq.s32.totalorder %s15, 1
    %p137 = por %p135, %p136
    %p138 = scmp.ne.s32.totalorder %s127, %s128
    %p139 = scmp.eq.s32.totalorder %s15, 0
    %p140 = por %p138, %p139
    %p141 = scmp.ne.s32.totalorder %s127, %s128
    %p142 = scmp.eq.s32.totalorder %s16, 1
    %p143 = por %p141, %p142
    %p145 = scmp.ne.s32.totalorder %s128, %s144
    %p146 = scmp.eq.s32.totalorder %s16, 0
    %p147 = por %p145, %p146
    %p148 = scmp.le.s32.totalorder 1, %s10
    %p149 = scmp.lt.s32.totalorder %s10, 3
    %p150 = pnand %p148, %p149
    %p151 = pneg %p150
    // Predicated region
    $region9: #{fwd.2} parent=5 // pred_check
      _
    $region10: #{fwd.2} parent=5 // pred_check_branch
      %153 = sbr.rel (%p150) target = $region12
    $region11: #{fwd.2} parent=5 // pred_region
      %s154 = ssub.s32 %s10, 1
    $region12: #{fwd.2} parent=5 // pred_fallthru
      _
    %p155 = scmp.lt.s32.totalorder %s10, 2
    // Predicated region
    $region13: #{fwd.2} parent=5 // pred_check
      %p156 = pneg %p155
    $region14: #{fwd.2} parent=5 // pred_check_branch
      %158 = sbr.rel (%p156) target = $region16
    $region15: #{fwd.2} parent=5 // pred_region
      // Predicated region
      $region17: #{fwd.2} parent=15 // pred_check
        %p159 = pneg %p30
      $region18: #{fwd.2} parent=15 // pred_check_branch
        %161 = sbr.rel (%p159) target = $region20
      $region19: #{fwd.2} parent=15 // pred_region
        %p162 = scmp.lt.s32.totalorder %s10, 1
        %s163 = scalar_select %p162, %s10, 1
        %s164 = smul.addr %s163, 4
        %s165 = scalar_lea.vmem %s0, %s164
      $region20: #{fwd.2} parent=15 // pred_fallthru
        _
      // Predicated region
      $region21: #{fwd.2} parent=15 // pred_check
        %p166 = pneg %p56
      $region22: #{fwd.2} parent=15 // pred_check_branch
        %168 = sbr.rel (%p166) target = $region24
      $region23: #{fwd.2} parent=15 // pred_region
        %p169 = scmp.lt.s32.totalorder %s10, 1
        %s170 = scalar_select %p169, %s10, 1
        %s171 = smul.addr %s170, 16
        %s172 = smul.addr %s171, 4
        %s173 = scalar_lea.vmem %s1, %s172
      $region24: #{fwd.2} parent=15 // pred_fallthru
        _
      // Predicated region
      $region25: #{fwd.2} parent=15 // pred_check
        %p174 = pneg %p82
      $region26: #{fwd.2} parent=15 // pred_check_branch
        %176 = sbr.rel (%p174) target = $region28
      $region27: #{fwd.2} parent=15 // pred_region
        %p177 = scmp.lt.s32.totalorder %s10, 1
        %s178 = scalar_select %p177, %s10, 1
        %s179 = smul.addr %s178, 16
        %s180 = smul.addr %s179, 4
        %s181 = scalar_lea.vmem %s2, %s180
      $region28: #{fwd.2} parent=15 // pred_fallthru
        _
      // Predicated region
      $region29: #{fwd.2} parent=15 // pred_check
        %p182 = pneg %p108
      $region30: #{fwd.2} parent=15 // pred_check_branch
        %184 = sbr.rel (%p182) target = $region32
      $region31: #{fwd.2} parent=15 // pred_region
        %p185 = scmp.lt.s32.totalorder %s10, 1
        %s186 = scalar_select %p185, %s10, 1
        %s187 = smul.addr %s186, 8
        %s188 = scalar_lea.vmem %s3, %s187
      $region32: #{fwd.2} parent=15 // pred_fallthru
        _
    $region16: #{fwd.2} parent=5 // pred_fallthru
      _
    %p189 = scmp.le.s32.totalorder 1, %s10
    %p190 = scmp.lt.s32.totalorder %s10, 3
    %p191 = pnand %p189, %p190
    %p192 = pneg %p191
    // Predicated region
    $region33: #{fwd.2} parent=5 // pred_check
      _
    $region34: #{fwd.2} parent=5 // pred_check_branch
      %194 = sbr.rel (%p191) target = $region36
    $region35: #{fwd.2} parent=5 // pred_region
      %s195 = ssub.s32 %s10, 1
      %p196 = scmp.lt.s32.totalorder %s15, 1
      %s197 = scalar_select %p196, %s15, 1
      %s198 = smul.addr %s197, 4
      %s199 = scalar_lea.vmem %s0, %s198
      %p200 = pneg %p36
      %p201 = pneg %p33
      %p202 = scmp.lt.s32.totalorder %s15, 1
      %s203 = scalar_select %p202, %s15, 1
      %s204 = smul.addr %s203, 16
      %s205 = smul.addr %s204, 4
      %s206 = scalar_lea.vmem %s1, %s205
      %p207 = pneg %p62
      %p208 = pneg %p59
      %p209 = scmp.lt.s32.totalorder %s15, 1
      %s210 = scalar_select %p209, %s15, 1
      %s211 = smul.addr %s210, 16
      %s212 = smul.addr %s211, 4
      %s213 = scalar_lea.vmem %s2, %s212
      %p214 = pneg %p88
      %p215 = pneg %p85
      %p216 = scmp.lt.s32.totalorder %s15, 1
      %s217 = scalar_select %p216, %s15, 1
      %s218 = smul.addr %s217, 8
      %s219 = scalar_lea.vmem %s3, %s218
      %p220 = pneg %p114
      %p221 = pneg %p111
      %p222 = pneg %p140
      %p223 = pneg %p137
      %p224 = scmp.lt.s32.totalorder %s15, 1
      %s225 = scalar_select %p224, %s15, 1
      %s226 = smul.addr %s225, 8
      %s227 = scalar_lea.vmem %s4, %s226
      %p228 = scmp.lt.s32.totalorder %s15, 1
      %s229 = scalar_select %p228, %s15, 1
      %s230 = smul.addr %s229, 4
      %s231 = scalar_lea.vmem %s0, %s230
      %p232 = scmp.lt.s32.totalorder %s15, 1
      %s233 = scalar_select %p232, %s15, 1
      %s234 = smul.addr %s233, 16
      %s235 = smul.addr %s234, 4
      %s236 = scalar_lea.vmem %s1, %s235
      %p237 = scmp.lt.s32.totalorder %s15, 1
      %s238 = scalar_select %p237, %s15, 1
      %s239 = smul.addr %s238, 16
      %s240 = smul.addr %s239, 4
      %s241 = scalar_lea.vmem %s2, %s240
      %p242 = scmp.lt.s32.totalorder %s15, 1
      %s243 = scalar_select %p242, %s15, 1
      %s244 = smul.addr %s243, 8
      %s245 = scalar_lea.vmem %s3, %s244
      %p246 = scmp.lt.s32.totalorder %s15, 1
      %s247 = scalar_select %p246, %s15, 1
      %s248 = smul.addr %s247, 8
      %s249 = scalar_lea.vmem %s4, %s248
      %v251 = vld [vmem:[%s231] sm:$0xf]
      %v252 = vld [vmem:[%s236] sm:$0xf]
      %v253 = vld [vmem:[%s236 + $0x4] sm:$0xf]
      %v254 = vld [vmem:[%s236 + $0x8] sm:$0xf]
      %v255 = vld [vmem:[%s236 + $0xc] sm:$0xf]
      %v256 = vld [vmem:[%s236 + $0x10] sm:$0xf]
      %v257 = vld [vmem:[%s236 + $0x14] sm:$0xf]
      %v258 = vld [vmem:[%s236 + $0x18] sm:$0xf]
      %v259 = vld [vmem:[%s236 + $0x1c] sm:$0xf]
      %v260 = vld [vmem:[%s236 + $0x20] sm:$0xf]
      %v261 = vld [vmem:[%s236 + $0x24] sm:$0xf]
      %v262 = vld [vmem:[%s236 + $0x28] sm:$0xf]
      %v263 = vld [vmem:[%s236 + $0x2c] sm:$0xf]
      %v264 = vld [vmem:[%s236 + $0x30] sm:$0xf]
      %v265 = vld [vmem:[%s236 + $0x34] sm:$0xf]
      %v266 = vld [vmem:[%s236 + $0x38] sm:$0xf]
      %v267 = vld [vmem:[%s236 + $0x3c] sm:$0xf]
      %v284 = vunpack.c.l.b16 %v252
      %v285 = vunpack.c.l.b16 %v253
      %v286 = vunpack.c.l.b16 %v254
      %v287 = vunpack.c.l.b16 %v255
      %v288 = vunpack.c.l.b16 %v256
      %v289 = vunpack.c.l.b16 %v257
      %v290 = vunpack.c.l.b16 %v258
      %v291 = vunpack.c.l.b16 %v259
      %v292 = vunpack.c.l.b16 %v260
      %v293 = vunpack.c.l.b16 %v261
      %v294 = vunpack.c.l.b16 %v262
      %v295 = vunpack.c.l.b16 %v263
      %v296 = vunpack.c.l.b16 %v264
      %v297 = vunpack.c.l.b16 %v265
      %v298 = vunpack.c.l.b16 %v266
      %v299 = vunpack.c.l.b16 %v267
      %v300 = vpack.c.b16 %v285, %v284
      %v301 = vpack.c.b16 %v287, %v286
      %v302 = vpack.c.b16 %v289, %v288
      %v303 = vpack.c.b16 %v291, %v290
      %v304 = vpack.c.b16 %v293, %v292
      %v305 = vpack.c.b16 %v295, %v294
      %v306 = vpack.c.b16 %v297, %v296
      %v307 = vpack.c.b16 %v299, %v298
      %316 = vmatprep.subr.bf16.mxu0 0
      %317 = vmatpush1.bf16.msra.mxu0 %v300
      %318 = vmatprep.subr.bf16.mxu0 0
      %319 = vmatpush1.bf16.msra.mxu0 %v301
      %320 = vmatprep.subr.bf16.mxu0 0
      %321 = vmatpush1.bf16.msra.mxu0 %v302
      %322 = vmatprep.subr.bf16.mxu0 0
      %323 = vmatpush1.bf16.msra.mxu0 %v303
      %324 = vmatprep.subr.bf16.mxu0 0
      %325 = vmatpush1.bf16.msra.mxu0 %v304
      %326 = vmatprep.subr.bf16.mxu0 0
      %327 = vmatpush1.bf16.msra.mxu0 %v305
      %328 = vmatprep.subr.bf16.mxu0 0
      %329 = vmatpush1.bf16.msra.mxu0 %v306
      %330 = vmatprep.subr.bf16.mxu0 0
      %331 = vmatpush1.bf16.msra.mxu0 %v307
      %332 = vmatprep.subr.bf16.mxu0 0
      %333 = vmatpush1.bf16.msra.mxu0 0
      %334 = vmatprep.subr.bf16.mxu0 0
      %335 = vmatpush1.bf16.msra.mxu0 0
      %336 = vmatprep.subr.bf16.mxu0 0
      %337 = vmatpush1.bf16.msra.mxu0 0
      %338 = vmatprep.subr.bf16.mxu0 0
      %339 = vmatpush1.bf16.msra.mxu0 0
      %340 = vmatprep.subr.bf16.mxu0 0
      %341 = vmatpush1.bf16.msra.mxu0 0
      %342 = vmatprep.subr.bf16.mxu0 0
      %343 = vmatpush1.bf16.msra.mxu0 0
      %344 = vmatprep.subr.bf16.mxu0 0
      %345 = vmatpush1.bf16.msra.mxu0 0
      %346 = vmatprep.subr.bf16.mxu0 0
      %347 = vmatpush1.bf16.msra.mxu0 0
      %348 = vmatprep.mubr.bf16.mxu0 0
      %349 = vmatmul.mubr.bf16.gmra.mrb[0].mxu0 %v251
      %v350 = vpop.f32.mrb[0].mxu0
      %v351 = vadd.f32 0.0, %v350
      %v352 = vpop.f32.mrb[0].mxu0
      %v353 = vpop.f32.mrb[0].mxu0
      %v354 = vpop.f32.mrb[0].mxu0
      %355 = vdwg.mxu0
      %v356 = vmax.f32 %v351, 0.0
      %v357 = vpack.c.bf16 %v356, %v356
      %v358 = vld [vmem:[%s241] sm:$0xf]
      %v359 = vld [vmem:[%s241 + $0x4] sm:$0xf]
      %v360 = vld [vmem:[%s241 + $0x8] sm:$0xf]
      %v361 = vld [vmem:[%s241 + $0xc] sm:$0xf]
      %v362 = vld [vmem:[%s241 + $0x10] sm:$0xf]
      %v363 = vld [vmem:[%s241 + $0x14] sm:$0xf]
      %v364 = vld [vmem:[%s241 + $0x18] sm:$0xf]
      %v365 = vld [vmem:[%s241 + $0x1c] sm:$0xf]
      %v366 = vld [vmem:[%s241 + $0x20] sm:$0xf]
      %v367 = vld [vmem:[%s241 + $0x24] sm:$0xf]
      %v368 = vld [vmem:[%s241 + $0x28] sm:$0xf]
      %v369 = vld [vmem:[%s241 + $0x2c] sm:$0xf]
      %v370 = vld [vmem:[%s241 + $0x30] sm:$0xf]
      %v371 = vld [vmem:[%s241 + $0x34] sm:$0xf]
      %v372 = vld [vmem:[%s241 + $0x38] sm:$0xf]
      %v373 = vld [vmem:[%s241 + $0x3c] sm:$0xf]
      %v374 = vld [vmem:[%s245] sm:$0xff]
      %v391 = vunpack.c.l.b16 %v358
      %v392 = vunpack.c.l.b16 %v359
      %v393 = vunpack.c.l.b16 %v360
      %v394 = vunpack.c.l.b16 %v361
      %v395 = vunpack.c.l.b16 %v362
      %v396 = vunpack.c.l.b16 %v363
      %v397 = vunpack.c.l.b16 %v364
      %v398 = vunpack.c.l.b16 %v365
      %v399 = vunpack.c.l.b16 %v366
      %v400 = vunpack.c.l.b16 %v367
      %v401 = vunpack.c.l.b16 %v368
      %v402 = vunpack.c.l.b16 %v369
      %v403 = vunpack.c.l.b16 %v370
      %v404 = vunpack.c.l.b16 %v371
      %v405 = vunpack.c.l.b16 %v372
      %v406 = vunpack.c.l.b16 %v373
      %v407 = vpack.c.b16 %v392, %v391
      %v408 = vpack.c.b16 %v394, %v393
      %v409 = vpack.c.b16 %v396, %v395
      %v410 = vpack.c.b16 %v398, %v397
      %v411 = vpack.c.b16 %v400, %v399
      %v412 = vpack.c.b16 %v402, %v401
      %v413 = vpack.c.b16 %v404, %v403
      %v414 = vpack.c.b16 %v406, %v405
      %423 = vmatprep.subr.bf16.mxu0 0
      %424 = vmatpush1.bf16.msra.mxu0 %v407
      %425 = vmatprep.subr.bf16.mxu0 0
      %426 = vmatpush1.bf16.msra.mxu0 %v408
      %427 = vmatprep.subr.bf16.mxu0 0
      %428 = vmatpush1.bf16.msra.mxu0 %v409
      %429 = vmatprep.subr.bf16.mxu0 0
      %430 = vmatpush1.bf16.msra.mxu0 %v410
      %431 = vmatprep.subr.bf16.mxu0 0
      %432 = vmatpush1.bf16.msra.mxu0 %v411
      %433 = vmatprep.subr.bf16.mxu0 0
      %434 = vmatpush1.bf16.msra.mxu0 %v412
      %435 = vmatprep.subr.bf16.mxu0 0
      %436 = vmatpush1.bf16.msra.mxu0 %v413
      %437 = vmatprep.subr.bf16.mxu0 0
      %438 = vmatpush1.bf16.msra.mxu0 %v414
      %439 = vmatprep.subr.bf16.mxu0 0
      %440 = vmatpush1.bf16.msra.mxu0 0
      %441 = vmatprep.subr.bf16.mxu0 0
      %442 = vmatpush1.bf16.msra.mxu0 0
      %443 = vmatprep.subr.bf16.mxu0 0
      %444 = vmatpush1.bf16.msra.mxu0 0
      %445 = vmatprep.subr.bf16.mxu0 0
      %446 = vmatpush1.bf16.msra.mxu0 0
      %447 = vmatprep.subr.bf16.mxu0 0
      %448 = vmatpush1.bf16.msra.mxu0 0
      %449 = vmatprep.subr.bf16.mxu0 0
      %450 = vmatpush1.bf16.msra.mxu0 0
      %451 = vmatprep.subr.bf16.mxu0 0
      %452 = vmatpush1.bf16.msra.mxu0 0
      %453 = vmatprep.subr.bf16.mxu0 0
      %454 = vmatpush1.bf16.msra.mxu0 0
      %455 = vmatprep.mubr.bf16.mxu0 0
      %456 = vmatmul.mubr.bf16.gmra.mrb[0].mxu0 %v357
      %v457 = vpop.f32.mrb[0].mxu0
      %v458 = vadd.f32 %v374, %v457
      %v459 = vpop.f32.mrb[0].mxu0
      %v460 = vpop.f32.mrb[0].mxu0
      %v461 = vpop.f32.mrb[0].mxu0
      %462 = vdwg.mxu0
      %463 = vst [vmem:[%s249] sm:$0xff] %v458
      %p464 = scmp.lt.s32.totalorder %s15, 1
      %s465 = scalar_select %p464, %s15, 1
      %s466 = smul.addr %s465, 8
      %s467 = scalar_lea.vmem %s4, %s466
      // Predicated region
      $region37: #{fwd.2} parent=35 // pred_check
        %p468 = pneg %p137
      $region38: #{fwd.2} parent=35 // pred_check_branch
        %470 = sbr.rel (%p468) target = $region40
      $region39: #{fwd.2} parent=35 // pred_region
        _
      $region40: #{fwd.2} parent=35 // pred_fallthru
        _
    $region36: #{fwd.2} parent=5 // pred_fallthru
      _
    %p471 = scmp.le.s32.totalorder 2, %s10
    // Predicated region
    $region41: #{fwd.2} parent=5 // pred_check
      %p472 = pneg %p471
    $region42: #{fwd.2} parent=5 // pred_check_branch
      %474 = sbr.rel (%p472) target = $region44
    $region43: #{fwd.2} parent=5 // pred_region
      %s475 = ssub.s32 %s10, 2
      // Predicated region
      $region45: #{fwd.2} parent=43 // pred_check
        %p476 = pneg %p143
      $region46: #{fwd.2} parent=43 // pred_check_branch
        %478 = sbr.rel (%p476) target = $region48
      $region47: #{fwd.2} parent=43 // pred_region
        %p479 = scmp.lt.s32.totalorder %s16, 1
        %s480 = scalar_select %p479, %s16, 1
        %s481 = smul.addr %s480, 8
        %s482 = scalar_lea.vmem %s4, %s481
      $region48: #{fwd.2} parent=43 // pred_fallthru
        _
    $region44: #{fwd.2} parent=5 // pred_fallthru
      _
  $region6: #{fwd.2} parent=0 // loop_footer
    %s14 = sadd.s32 1, %s10
  $region7: #{fwd.2} parent=0 // loop_footer_branch
    %9 = sbr.rel target = $region3
  $region8: #{fwd.2} parent=0 // loop_exit
    _

// kernel: fwd.3
$region0: #{fwd.3}
  #allocation0 [shape = 'u32[]', space=smem, size = 0x4, offset = 0x4, fixed_abs, tag = 'smem constant byte address 0x4 - core index']
  #allocation1 [shape = 'u32[144,128]{1,0:T(1,128)}', space=vmem, size = 0x12000, scoped, tag = 'internal scratch']
  %s0 = inlined_call_operand.vmem [shape: bf16[1,8,128], index: 0, kind: input, shape index: {}]
  %s1 = inlined_call_operand.vmem [shape: bf16[1,128,128], index: 1, kind: input, shape index: {}]
  %s2 = inlined_call_operand.vmem [shape: bf16[1,128,128], index: 2, kind: input, shape index: {}]
  %s3 = inlined_call_operand.vmem [shape: f32[1,8,128], index: 3, kind: input, shape index: {}]
  %s4 = inlined_call_operand.vmem [shape: f32[1,8,128], index: 4, kind: output, shape index: {}]
  %s5 = sld [smem:[#allocation0]]
  $region26: #{fwd.3} parent=0
    _
  %s7 = ssub.s32 1, %s5
  %s8 = scalar_select 0, %s7, %s5
  // Predicated region
  $region2: #{fwd.3} parent=0 // pred_check
    _
  $region3: #{fwd.3} parent=0 // pred_check_branch
    %10 = sbr.rel (0) target = $region5
  $region4: #{fwd.3} parent=0 // pred_region
    _
  $region5: #{fwd.3} parent=0 // pred_fallthru
    _
  // Predicated region
  $region6: #{fwd.3} parent=0 // pred_check
    _
  $region7: #{fwd.3} parent=0 // pred_check_branch
    %12 = sbr.rel (0) target = $region9
  $region8: #{fwd.3} parent=0 // pred_region
    _
  $region9: #{fwd.3} parent=0 // pred_fallthru
    _
  // Predicated region
  $region10: #{fwd.3} parent=0 // pred_check
    _
  $region11: #{fwd.3} parent=0 // pred_check_branch
    %14 = sbr.rel (0) target = $region13
  $region12: #{fwd.3} parent=0 // pred_region
    _
  $region13: #{fwd.3} parent=0 // pred_fallthru
    _
  // Predicated region
  $region14: #{fwd.3} parent=0 // pred_check
    _
  $region15: #{fwd.3} parent=0 // pred_check_branch
    %16 = sbr.rel (0) target = $region17
  $region16: #{fwd.3} parent=0 // pred_region
    _
  $region17: #{fwd.3} parent=0 // pred_fallthru
    _
  %v18 = vld [vmem:[%s0] sm:$0xf]
  %v19 = vld [vmem:[%s1] sm:$0xf]
  %v20 = vld [vmem:[%s1 + $0x4] sm:$0xf]
  %v21 = vld [vmem:[%s1 + $0x8] sm:$0xf]
  %v22 = vld [vmem:[%s1 + $0xc] sm:$0xf]
  %v23 = vld [vmem:[%s1 + $0x10] sm:$0xf]
  %v24 = vld [vmem:[%s1 + $0x14] sm:$0xf]
  %v25 = vld [vmem:[%s1 + $0x18] sm:$0xf]
  %v26 = vld [vmem:[%s1 + $0x1c] sm:$0xf]
  %v27 = vld [vmem:[%s1 + $0x20] sm:$0xf]
  %v28 = vld [vmem:[%s1 + $0x24] sm:$0xf]
  %v29 = vld [vmem:[%s1 + $0x28] sm:$0xf]
  %v30 = vld [vmem:[%s1 + $0x2c] sm:$0xf]
  %v31 = vld [vmem:[%s1 + $0x30] sm:$0xf]
  %v32 = vld [vmem:[%s1 + $0x34] sm:$0xf]
  %v33 = vld [vmem:[%s1 + $0x38] sm:$0xf]
  %v34 = vld [vmem:[%s1 + $0x3c] sm:$0xf]
  %v51 = vunpack.c.l.b16 %v19
  %v52 = vunpack.c.l.b16 %v20
  %v53 = vunpack.c.l.b16 %v21
  %v54 = vunpack.c.l.b16 %v22
  %v55 = vunpack.c.l.b16 %v23
  %v56 = vunpack.c.l.b16 %v24
  %v57 = vunpack.c.l.b16 %v25
  %v58 = vunpack.c.l.b16 %v26
  %v59 = vunpack.c.l.b16 %v27
  %v60 = vunpack.c.l.b16 %v28
  %v61 = vunpack.c.l.b16 %v29
  %v62 = vunpack.c.l.b16 %v30
  %v63 = vunpack.c.l.b16 %v31
  %v64 = vunpack.c.l.b16 %v32
  %v65 = vunpack.c.l.b16 %v33
  %v66 = vunpack.c.l.b16 %v34
  %v67 = vpack.c.b16 %v52, %v51
  %v68 = vpack.c.b16 %v54, %v53
  %v69 = vpack.c.b16 %v56, %v55
  %v70 = vpack.c.b16 %v58, %v57
  %v71 = vpack.c.b16 %v60, %v59
  %v72 = vpack.c.b16 %v62, %v61
  %v73 = vpack.c.b16 %v64, %v63
  %v74 = vpack.c.b16 %v66, %v65
  %83 = vmatprep.subr.bf16.mxu0 0
  %84 = vmatpush1.bf16.msra.mxu0 %v67
  %85 = vmatprep.subr.bf16.mxu0 0
  %86 = vmatpush1.bf16.msra.mxu0 %v68
  %87 = vmatprep.subr.bf16.mxu0 0
  %88 = vmatpush1.bf16.msra.mxu0 %v69
  %89 = vmatprep.subr.bf16.mxu0 0
  %90 = vmatpush1.bf16.msra.mxu0 %v70
  %91 = vmatprep.subr.bf16.mxu0 0
  %92 = vmatpush1.bf16.msra.mxu0 %v71
  %93 = vmatprep.subr.bf16.mxu0 0
  %94 = vmatpush1.bf16.msra.mxu0 %v72
  %95 = vmatprep.subr.bf16.mxu0 0
  %96 = vmatpush1.bf16.msra.mxu0 %v73
  %97 = vmatprep.subr.bf16.mxu0 0
  %98 = vmatpush1.bf16.msra.mxu0 %v74
  %99 = vmatprep.subr.bf16.mxu0 0
  %100 = vmatpush1.bf16.msra.mxu0 0
  %101 = vmatprep.subr.bf16.mxu0 0
  %102 = vmatpush1.bf16.msra.mxu0 0
  %103 = vmatprep.subr.bf16.mxu0 0
  %104 = vmatpush1.bf16.msra.mxu0 0
  %105 = vmatprep.subr.bf16.mxu0 0
  %106 = vmatpush1.bf16.msra.mxu0 0
  %107 = vmatprep.subr.bf16.mxu0 0
  %108 = vmatpush1.bf16.msra.mxu0 0
  %109 = vmatprep.subr.bf16.mxu0 0
  %110 = vmatpush1.bf16.msra.mxu0 0
  %111 = vmatprep.subr.bf16.mxu0 0
  %112 = vmatpush1.bf16.msra.mxu0 0
  %113 = vmatprep.subr.bf16.mxu0 0
  %114 = vmatpush1.bf16.msra.mxu0 0
  %115 = vmatprep.mubr.bf16.mxu0 0
  %116 = vmatmul.mubr.bf16.gmra.mrb[0].mxu0 %v18
  %v117 = vpop.f32.mrb[0].mxu0
  %v118 = vadd.f32 0.0, %v117
  %v119 = vpop.f32.mrb[0].mxu0
  %v120 = vpop.f32.mrb[0].mxu0
  %v121 = vpop.f32.mrb[0].mxu0
  %122 = vdwg.mxu0
  %v123 = vmax.f32 %v118, 0.0
  %v124 = vpack.c.bf16 %v123, %v123
  %v125 = vld [vmem:[%s2] sm:$0xf]
  %v126 = vld [vmem:[%s2 + $0x4] sm:$0xf]
  %v127 = vld [vmem:[%s2 + $0x8] sm:$0xf]
  %v128 = vld [vmem:[%s2 + $0xc] sm:$0xf]
  %v129 = vld [vmem:[%s2 + $0x10] sm:$0xf]
  %v130 = vld [vmem:[%s2 + $0x14] sm:$0xf]
  %v131 = vld [vmem:[%s2 + $0x18] sm:$0xf]
  %v132 = vld [vmem:[%s2 + $0x1c] sm:$0xf]
  %v133 = vld [vmem:[%s2 + $0x20] sm:$0xf]
  %v134 = vld [vmem:[%s2 + $0x24] sm:$0xf]
  %v135 = vld [vmem:[%s2 + $0x28] sm:$0xf]
  %v136 = vld [vmem:[%s2 + $0x2c] sm:$0xf]
  %v137 = vld [vmem:[%s2 + $0x30] sm:$0xf]
  %v138 = vld [vmem:[%s2 + $0x34] sm:$0xf]
  %v139 = vld [vmem:[%s2 + $0x38] sm:$0xf]
  %v140 = vld [vmem:[%s2 + $0x3c] sm:$0xf]
  %v141 = vld [vmem:[%s3] sm:$0xff]
  %v158 = vunpack.c.l.b16 %v125
  %v159 = vunpack.c.l.b16 %v126
  %v160 = vunpack.c.l.b16 %v127
  %v161 = vunpack.c.l.b16 %v128
  %v162 = vunpack.c.l.b16 %v129
  %v163 = vunpack.c.l.b16 %v130
  %v164 = vunpack.c.l.b16 %v131
  %v165 = vunpack.c.l.b16 %v132
  %v166 = vunpack.c.l.b16 %v133
  %v167 = vunpack.c.l.b16 %v134
  %v168 = vunpack.c.l.b16 %v135
  %v169 = vunpack.c.l.b16 %v136
  %v170 = vunpack.c.l.b16 %v137
  %v171 = vunpack.c.l.b16 %v138
  %v172 = vunpack.c.l.b16 %v139
  %v173 = vunpack.c.l.b16 %v140
  %v174 = vpack.c.b16 %v159, %v158
  %v175 = vpack.c.b16 %v161, %v160
  %v176 = vpack.c.b16 %v163, %v162
  %v177 = vpack.c.b16 %v165, %v164
  %v178 = vpack.c.b16 %v167, %v166
  %v179 = vpack.c.b16 %v169, %v168
  %v180 = vpack.c.b16 %v171, %v170
  %v181 = vpack.c.b16 %v173, %v172
  %190 = vmatprep.subr.bf16.mxu0 0
  %191 = vmatpush1.bf16.msra.mxu0 %v174
  %192 = vmatprep.subr.bf16.mxu0 0
  %193 = vmatpush1.bf16.msra.mxu0 %v175
  %194 = vmatprep.subr.bf16.mxu0 0
  %195 = vmatpush1.bf16.msra.mxu0 %v176
  %196 = vmatprep.subr.bf16.mxu0 0
  %197 = vmatpush1.bf16.msra.mxu0 %v177
  %198 = vmatprep.subr.bf16.mxu0 0
  %199 = vmatpush1.bf16.msra.mxu0 %v178
  %200 = vmatprep.subr.bf16.mxu0 0
  %201 = vmatpush1.bf16.msra.mxu0 %v179
  %202 = vmatprep.subr.bf16.mxu0 0
  %203 = vmatpush1.bf16.msra.mxu0 %v180
  %204 = vmatprep.subr.bf16.mxu0 0
  %205 = vmatpush1.bf16.msra.mxu0 %v181
  %206 = vmatprep.subr.bf16.mxu0 0
  %207 = vmatpush1.bf16.msra.mxu0 0
  %208 = vmatprep.subr.bf16.mxu0 0
  %209 = vmatpush1.bf16.msra.mxu0 0
  %210 = vmatprep.subr.bf16.mxu0 0
  %211 = vmatpush1.bf16.msra.mxu0 0
  %212 = vmatprep.subr.bf16.mxu0 0
  %213 = vmatpush1.bf16.msra.mxu0 0
  %214 = vmatprep.subr.bf16.mxu0 0
  %215 = vmatpush1.bf16.msra.mxu0 0
  %216 = vmatprep.subr.bf16.mxu0 0
  %217 = vmatpush1.bf16.msra.mxu0 0
  %218 = vmatprep.subr.bf16.mxu0 0
  %219 = vmatpush1.bf16.msra.mxu0 0
  %220 = vmatprep.subr.bf16.mxu0 0
  %221 = vmatpush1.bf16.msra.mxu0 0
  %222 = vmatprep.mubr.bf16.mxu0 0
  %223 = vmatmul.mubr.bf16.gmra.mrb[0].mxu0 %v124
  %v224 = vpop.f32.mrb[0].mxu0
  %v225 = vadd.f32 %v141, %v224
  %v226 = vpop.f32.mrb[0].mxu0
  %v227 = vpop.f32.mrb[0].mxu0
  %v228 = vpop.f32.mrb[0].mxu0
  %229 = vdwg.mxu0
  %230 = vst [vmem:[%s4] sm:$0xff] %v225
  // Predicated region
  $region18: #{fwd.3} parent=0 // pred_check
    _
  $region19: #{fwd.3} parent=0 // pred_check_branch
    %232 = sbr.rel (0) target = $region21
  $region20: #{fwd.3} parent=0 // pred_region
    _
  $region21: #{fwd.3} parent=0 // pred_fallthru
    _
  // Predicated region
  $region22: #{fwd.3} parent=0 // pred_check
    _
  $region23: #{fwd.3} parent=0 // pred_check_branch
    %234 = sbr.rel (0) target = $region25
  $region24: #{fwd.3} parent=0 // pred_region
    _
  $region25: #{fwd.3} parent=0 // pred_fallthru
    _

</llo_original>
